<compile_context>
chip_gen: v5e
topology: v5e:2x2
jax: 0.10.0
libtpu: 0.0.40
codegen_flags: <defaults>
</compile_context>

<pallas_src>
import jax
import jax.numpy as jnp
from jax.experimental import pallas as pl
from jax.experimental.pallas import tpu as pltpu

EPS = 1e-5  # nn.LayerNorm default


# --------------------------------------------------------------------------- #
# Kernel body
# --------------------------------------------------------------------------- #
def _tdln_kernel(x_ref, gamma_ref, beta_ref, o_ref):
    # x_ref / o_ref: (BB, C, tile_T) ; gamma_ref / beta_ref: (1, C, 1) f32.
    x = x_ref[...].astype(jnp.float32)
    inv_c = 1.0 / x.shape[1]                                   # static Python float

    # One-pass moments over C (sublane axis). f32 accumulation.
    s1 = jnp.sum(x, axis=1, keepdims=True)                     # (BB, 1, tT)
    s2 = jnp.sum(x * x, axis=1, keepdims=True)                 # (BB, 1, tT)
    mean = s1 * inv_c
    # Guard against catastrophic cancellation when |mean| >> sigma.
    var = jnp.maximum(s2 * inv_c - mean * mean, 0.0)
    inv = jax.lax.rsqrt(var + EPS)                             # EUP rsqrt

    g = gamma_ref[...]                                         # (1, C, 1)
    b = beta_ref[...]                                          # (1, C, 1)
    o_ref[...] = ((x - mean) * inv * g + b).astype(o_ref.dtype)


# --------------------------------------------------------------------------- #
# Generation-aware VMEM sizing + tiling choice
# --------------------------------------------------------------------------- #
def _vmem_caps():
    """(block-sizing budget, scoped vmem limit) derived from chip capacity."""
    cap = None
    try:
        cap = int(getattr(pltpu.get_tpu_info(), "vmem_capacity_bytes", 0)) or None
    except Exception:
        cap = None
    if cap is None:
        cap = 64 << 20            # conservative fallback (v7x per-TC capacity)
    budget = cap // 4             # ~25% for block sizing (DMA bufs + temps)
    limit = (cap * 7) // 10       # ~70% scoped limit, headroom for compiler scratch
    return budget, limit


def _choose_tiling(B, C, T, itemsize, vmem_budget_bytes, max_tile_t=None):
    """Pick (BB, tile_T) so BB*C*tile_T fits the per-step VMEM budget.

    Per-element accounting: 2x input + 2x output double-buffered DMA blocks at
    the I/O dtype, plus ~2 block-sized f32 temporaries inside the kernel
    (the f32 cast of x and the epilogue intermediate).
    """
    itemsize = max(int(itemsize), 1)
    bytes_per_elem = 4 * itemsize + 2 * 4          # 4 DMA buffers + 2 f32 temps
    per_lane = C * bytes_per_elem                  # per batch-row, per lane

    want_full_t = (max_tile_t is None) or (max_tile_t >= T)

    # Preferred: full-T lane blocks (single contiguous C*T copy per block),
    # grow the batch block instead.
    if want_full_t and T * per_lane <= vmem_budget_bytes:
        bb = int(max(1, min(B, vmem_budget_bytes // (T * per_lane))))
        # Keep >= 2 grid steps so v7x's second TensorCore gets work.
        if bb >= B and B > 1:
            bb = -(-B // 2)                        # ceil(B/2) -> grid_b == 2
        if B == 1 and T >= 1024:
            # Only one batch row: split T in two (multiple of 128, >= 512).
            half = -(-T // 2)
            half = ((half + 127) // 128) * 128
            return 1, int(min(T, max(512, half)))
        return bb, T

    # Must split T: lane tiles below full extent must be multiples of 128.
    cap = vmem_budget_bytes // per_lane
    if max_tile_t is not None:
        cap = min(cap, max_tile_t)
    tile_t = max(128, (cap // 128) * 128)
    if max_tile_t is None or max_tile_t >= 512:
        # >=512 floor keeps strided DMA segments at efficient granularity.
        tile_t = max(tile_t, 512)
    tile_t = min(tile_t, ((T + 127) // 128) * 128)
    if tile_t >= T:
        return 1, T
    return 1, int(tile_t)


# --------------------------------------------------------------------------- #
# Wrapper
# --------------------------------------------------------------------------- #
def time_distributed_layer_norm(x, gamma, beta, *, max_tile_t=None):
    """x: (B, C, T).  gamma, beta: (C,).  Returns (B, C, T)."""
    B, C, T = x.shape
    vmem_budget, vmem_limit = _vmem_caps()
    bb, tile_t = _choose_tiling(
        B, C, T, x.dtype.itemsize, vmem_budget, max_tile_t=max_tile_t
    )
    grid_b = pl.cdiv(B, bb)
    grid_t = pl.cdiv(T, tile_t)

    # Pre-shaped (1, C, 1) f32 so the kernel broadcast is a plain vreg replicate.
    gamma3 = gamma.astype(jnp.float32).reshape(1, C, 1)
    beta3 = beta.astype(jnp.float32).reshape(1, C, 1)

    return pl.pallas_call(
        _tdln_kernel,
        out_shape=jax.ShapeDtypeStruct((B, C, T), x.dtype),
        grid_spec=pltpu.PrefetchScalarGridSpec(
            num_scalar_prefetch=0,
            grid=(grid_b, grid_t),
            in_specs=[
                pl.BlockSpec((bb, C, tile_t), lambda b, t: (b, 0, t)),
                pl.BlockSpec(memory_space=pltpu.MemorySpace.VMEM),  # gamma, resident
                pl.BlockSpec(memory_space=pltpu.MemorySpace.VMEM),  # beta, resident
            ],
            out_specs=pl.BlockSpec((bb, C, tile_t), lambda b, t: (b, 0, t)),
        ),
        compiler_params=pltpu.CompilerParams(
            dimension_semantics=("parallel", "parallel"),
            vmem_limit_bytes=int(vmem_limit),
        ),
    )(x, gamma3, beta3)


# --------------------------------------------------------------------------- #
# Pure-JAX reference (mirrors the PyTorch module exactly)
# --------------------------------------------------------------------------- #
def _reference(x, gamma, beta):
    xt = jnp.transpose(x, (0, 2, 1)).astype(jnp.float32)
    mean = jnp.mean(xt, axis=-1, keepdims=True)
    var = jnp.mean((xt - mean) ** 2, axis=-1, keepdims=True)
    y = (xt - mean) / jnp.sqrt(var + EPS) * gamma.astype(jnp.float32) + beta.astype(
        jnp.float32
    )
    return jnp.transpose(y, (0, 2, 1)).astype(x.dtype)


if __name__ == "__main__":
    key = jax.random.PRNGKey(0)
    kx, kg, kb = jax.random.split(key, 3)

    # Case 1: small shape matching the module: (batch, size=C, time).
    B, C, T = 2, 32, 16
    x = jax.random.normal(kx, (B, C, T), dtype=jnp.float32)
    gamma = 1.0 + 0.1 * jax.random.normal(kg, (C,), dtype=jnp.float32)
    beta = 0.1 * jax.random.normal(kb, (C,), dtype=jnp.float32)

    out = jax.block_until_ready(time_distributed_layer_norm(x, gamma, beta))
    ref = _reference(x, gamma, beta)
    assert out.shape == x.shape
    assert jnp.allclose(out, ref, atol=1e-5, rtol=1e-5)

    # Case 2: T split into multiple lane tiles (forced small tile) with a
    # ragged last block -> exercises grid_t > 1 + padded-lane path.
    B2, C2, T2 = 2, 32, 400
    x2 = jax.random.normal(kx, (B2, C2, T2), dtype=jnp.float32)
    out2 = jax.block_until_ready(
        time_distributed_layer_norm(x2, gamma, beta, max_tile_t=128)
    )
    ref2 = _reference(x2, gamma, beta)
    assert out2.shape == x2.shape
    assert jnp.allclose(out2, ref2, atol=1e-5, rtol=1e-5)

    # Case 3: bf16 I/O, f32 statistics inside the kernel.
    x3 = jax.random.normal(kb, (B, C, T), dtype=jnp.bfloat16)
    out3 = jax.block_until_ready(time_distributed_layer_norm(x3, gamma, beta))
    ref3 = _reference(x3, gamma, beta)
    assert out3.dtype == jnp.bfloat16
    assert jnp.allclose(
        out3.astype(jnp.float32), ref3.astype(jnp.float32), atol=3e-2, rtol=3e-2
    )

    print("KERNEL_OK")
</pallas_src>

<mosaic_0001>
module attributes {stable_mosaic.version = 11 : i64} {
  func.func @_tdln_kernel(%arg0: i32, %arg1: i32, %arg2: memref<1x32x16xf32, #tpu.memory_space<vmem>>, %arg3: memref<1x32x1xf32, #tpu.memory_space<vmem>>, %arg4: memref<1x32x1xf32, #tpu.memory_space<vmem>>, %arg5: memref<1x32x16xf32, #tpu.memory_space<vmem>>) attributes {dimension_semantics = [#tpu.dimension_semantics<parallel>, #tpu.dimension_semantics<parallel>], iteration_bounds = array<i64: 2, 1>, scalar_prefetch = 0 : i64, scratch_operands = 0 : i64, tpu.core_type = #tpu.core_type<tc>, window_params = [{transform_indices = @transform_0, window_bounds = array<i64: 1, 32, 16>}, {pipeline_mode = #tpu.pipeline_mode<synchronous>, transform_indices = @transform_1, window_bounds = array<i64: 1, 32, 1>}, {pipeline_mode = #tpu.pipeline_mode<synchronous>, transform_indices = @transform_2, window_bounds = array<i64: 1, 32, 1>}, {transform_indices = @transform_3, window_bounds = array<i64: 1, 32, 16>}]} {
    %c0 = arith.constant 0 : index
    %c0_0 = arith.constant 0 : index
    %c0_1 = arith.constant 0 : index
    %0 = vector.load %arg2[%c0, %c0_0, %c0_1] : memref<1x32x16xf32, #tpu.memory_space<vmem>>, vector<1x32x16xf32>
    %cst = arith.constant dense<0.000000e+00> : vector<1x16xf32>
    %1 = vector.multi_reduction <add>, %0, %cst [1] : vector<1x32x16xf32> to vector<1x16xf32>
    %2 = vector.shape_cast %1 : vector<1x16xf32> to vector<1x1x16xf32>
    %3 = arith.mulf %0, %0 : vector<1x32x16xf32>
    %cst_2 = arith.constant dense<0.000000e+00> : vector<1x16xf32>
    %4 = vector.multi_reduction <add>, %3, %cst_2 [1] : vector<1x32x16xf32> to vector<1x16xf32>
    %5 = vector.shape_cast %4 : vector<1x16xf32> to vector<1x1x16xf32>
    %cst_3 = arith.constant 3.125000e-02 : f32
    %6 = vector.broadcast %cst_3 : f32 to vector<1x1x16xf32>
    %7 = arith.mulf %2, %6 : vector<1x1x16xf32>
    %cst_4 = arith.constant 3.125000e-02 : f32
    %8 = vector.broadcast %cst_4 : f32 to vector<1x1x16xf32>
    %9 = arith.mulf %5, %8 : vector<1x1x16xf32>
    %10 = arith.mulf %7, %7 : vector<1x1x16xf32>
    %11 = arith.subf %9, %10 : vector<1x1x16xf32>
    %cst_5 = arith.constant 0.000000e+00 : f32
    %12 = vector.broadcast %cst_5 : f32 to vector<1x1x16xf32>
    %13 = arith.maximumf %11, %12 : vector<1x1x16xf32>
    %cst_6 = arith.constant 9.99999974E-6 : f32
    %14 = vector.broadcast %cst_6 : f32 to vector<1x1x16xf32>
    %15 = arith.addf %13, %14 : vector<1x1x16xf32>
    %16 = math.rsqrt %15 : vector<1x1x16xf32>
    %c0_7 = arith.constant 0 : index
    %c0_8 = arith.constant 0 : index
    %c0_9 = arith.constant 0 : index
    %17 = vector.load %arg3[%c0_7, %c0_8, %c0_9] : memref<1x32x1xf32, #tpu.memory_space<vmem>>, vector<1x32x1xf32>
    %c0_10 = arith.constant 0 : index
    %c0_11 = arith.constant 0 : index
    %c0_12 = arith.constant 0 : index
    %18 = vector.load %arg4[%c0_10, %c0_11, %c0_12] : memref<1x32x1xf32, #tpu.memory_space<vmem>>, vector<1x32x1xf32>
    %19 = vector.broadcast %7 : vector<1x1x16xf32> to vector<1x32x16xf32>
    %20 = arith.subf %0, %19 : vector<1x32x16xf32>
    %21 = vector.broadcast %16 : vector<1x1x16xf32> to vector<1x32x16xf32>
    %22 = arith.mulf %20, %21 : vector<1x32x16xf32>
    %23 = vector.broadcast %17 : vector<1x32x1xf32> to vector<1x32x16xf32>
    %24 = arith.mulf %22, %23 : vector<1x32x16xf32>
    %25 = vector.broadcast %18 : vector<1x32x1xf32> to vector<1x32x16xf32>
    %26 = arith.addf %24, %25 : vector<1x32x16xf32>
    %c0_13 = arith.constant 0 : index
    %c0_14 = arith.constant 0 : index
    %c0_15 = arith.constant 0 : index
    %27 = vector.load %arg5[%c0_13, %c0_14, %c0_15] : memref<1x32x16xf32, #tpu.memory_space<vmem>>, vector<1x32x16xf32>
    tpu.vector_store %arg5[%c0_13, %c0_14, %c0_15], %26 {strides = array<i32>} : memref<1x32x16xf32, #tpu.memory_space<vmem>>, vector<1x32x16xf32>,
    return
  }
  func.func @transform_0(%arg0: i32, %arg1: i32) -> (i32, i32, i32) {
    %c0_i32 = arith.constant 0 : i32
    %c0_i32_0 = arith.constant 0 : i32
    return %arg0, %c0_i32, %arg1 : i32, i32, i32
  }
  func.func @transform_1(%arg0: i32, %arg1: i32) -> (i32, i32, i32) {
    %c0_i32 = arith.constant 0 : i32
    %c0_i32_0 = arith.constant 0 : i32
    %c0_i32_1 = arith.constant 0 : i32
    %c0_i32_2 = arith.constant 0 : i32
    return %c0_i32, %c0_i32_0, %c0_i32_1 : i32, i32, i32
  }
  func.func @transform_2(%arg0: i32, %arg1: i32) -> (i32, i32, i32) {
    %c0_i32 = arith.constant 0 : i32
    %c0_i32_0 = arith.constant 0 : i32
    %c0_i32_1 = arith.constant 0 : i32
    %c0_i32_2 = arith.constant 0 : i32
    return %c0_i32, %c0_i32_0, %c0_i32_1 : i32, i32, i32
  }
  func.func @transform_3(%arg0: i32, %arg1: i32) -> (i32, i32, i32) {
    %c0_i32 = arith.constant 0 : i32
    %c0_i32_0 = arith.constant 0 : i32
    return %arg0, %c0_i32, %arg1 : i32, i32, i32
  }
}

</mosaic_0001>

<llo_original>
// kernel: tpu_custom_call.1
$region0: #{tpu_custom_call.1}
  #allocation0 [shape = 'u32[]', space=smem, size = 0x4, offset = 0x4, fixed_abs, tag = 'smem constant byte address 0x4 - core index']
  #allocation1 [shape = 'u32[72,128]{1,0:T(1,128)}', space=vmem, size = 0x9000, scoped, tag = 'internal scratch']
  %s0 = inlined_call_operand.vmem [shape: f32[2,32,16], index: 0, kind: input, shape index: {}]
  %s1 = inlined_call_operand.vmem [shape: f32[1,32,1], index: 1, kind: input, shape index: {}]
  %s2 = inlined_call_operand.vmem [shape: f32[1,32,1], index: 2, kind: input, shape index: {}]
  %s3 = inlined_call_operand.vmem [shape: f32[2,32,16], index: 3, kind: output, shape index: {}]
  %s4 = sld [smem:[#allocation0]]
  $region45: #{tpu_custom_call.1} parent=0
    _
  %s6 = ssub.s32 1, %s4
  %s7 = scalar_select 0, %s6, %s4
  loop: start=0, step=1, limit=4
  $region2: #{tpu_custom_call.1} parent=0 // loop_pre_header
    _
  $region3: #{tpu_custom_call.1} parent=0 // loop_header
    %s9 = sphi 0, %s13
    %p10 = scmp.ge.s32.totalorder %s9, 4
    %s16 = sphi 0, %s28
    %s17 = sphi 0, %s24
    %s18 = sphi 0, %s16
    %s19 = sphi 0, %s17
    %s20 = sphi 0, %s18
    %s21 = sphi 0, %s19
    %s33 = sphi 0, %s35
    %s36 = sphi 0, %s33
    %s37 = sphi 0, %s36
    %s53 = sphi 0, %s37
    %s57 = sphi 0, %s57
    %s59 = sphi 0, %s57
    %s60 = sphi 0, %s59
    %s74 = sphi 0, %s60
    %s78 = sphi 0, %s78
    %s80 = sphi 0, %s78
    %s81 = sphi 0, %s80
    %s95 = sphi 0, %s81
    %s103 = sphi 0, %s105
    %s106 = sphi 0, %s103
    %s107 = sphi 0, %s106
    %s123 = sphi 0, %s107
  $region4: #{tpu_custom_call.1} parent=0 // loop_header_branch
    %12 = sbr.rel (%p10) target = $region8
  $region5: #{tpu_custom_call.1} parent=0 // loop_body
    %s14 = ssub.s32 %s9, 1
    %s15 = ssub.s32 %s9, 2
    %s22 = sadd.s32 1, %s17
    %p23 = scmp.ge.s32.totalorder %s22, 1
    %s24 = scalar_select %p23, 0, %s22
    %s25 = sadd.s32 1, %s16
    %s26 = scalar_select %p23, %s25, %s16
    %p27 = scmp.ge.s32.totalorder %s26, 2
    %s28 = scalar_select %p27, 0, %s26
    %s29 = ssub.s32 %s16, %s28
    %s30 = ssub.s32 %s17, %s24
    %s31 = sor.u32 %s29, %s30
    %p32 = scmp.eq.s32.totalorder %s31, 0
    %s34 = sadd.s32 %s33, 1
    %s35 = scalar_select %p32, %s33, %s34
    %p38 = pneg %p32
    %p39 = scmp.eq.s32.totalorder %s9, 1
    %p40 = por %p38, %p39
    %p41 = scmp.ne.s32.totalorder %s33, %s36
    %p42 = scmp.eq.s32.totalorder %s9, 0
    %p43 = por %p41, %p42
    %p44 = scmp.ne.s32.totalorder %s33, %s36
    %p45 = scmp.eq.s32.totalorder %s14, 1
    %p46 = por %p44, %p45
    %p47 = scmp.ne.s32.totalorder %s36, %s37
    %p48 = scmp.eq.s32.totalorder %s14, 0
    %p49 = por %p47, %p48
    %p50 = scmp.ne.s32.totalorder %s36, %s37
    %p51 = scmp.eq.s32.totalorder %s15, 1
    %p52 = por %p50, %p51
    %p54 = scmp.ne.s32.totalorder %s37, %s53
    %p55 = scmp.eq.s32.totalorder %s15, 0
    %p56 = por %p54, %p55
    %s58 = sadd.s32 %s57, 1
    %p61 = scmp.eq.s32.totalorder %s9, 1
    %p62 = scmp.ne.s32.totalorder %s57, %s59
    %p63 = scmp.eq.s32.totalorder %s9, 0
    %p64 = por %p62, %p63
    %p65 = scmp.ne.s32.totalorder %s57, %s59
    %p66 = scmp.eq.s32.totalorder %s14, 1
    %p67 = por %p65, %p66
    %p68 = scmp.ne.s32.totalorder %s59, %s60
    %p69 = scmp.eq.s32.totalorder %s14, 0
    %p70 = por %p68, %p69
    %p71 = scmp.ne.s32.totalorder %s59, %s60
    %p72 = scmp.eq.s32.totalorder %s15, 1
    %p73 = por %p71, %p72
    %p75 = scmp.ne.s32.totalorder %s60, %s74
    %p76 = scmp.eq.s32.totalorder %s15, 0
    %p77 = por %p75, %p76
    %s79 = sadd.s32 %s78, 1
    %p82 = scmp.eq.s32.totalorder %s9, 1
    %p83 = scmp.ne.s32.totalorder %s78, %s80
    %p84 = scmp.eq.s32.totalorder %s9, 0
    %p85 = por %p83, %p84
    %p86 = scmp.ne.s32.totalorder %s78, %s80
    %p87 = scmp.eq.s32.totalorder %s14, 1
    %p88 = por %p86, %p87
    %p89 = scmp.ne.s32.totalorder %s80, %s81
    %p90 = scmp.eq.s32.totalorder %s14, 0
    %p91 = por %p89, %p90
    %p92 = scmp.ne.s32.totalorder %s80, %s81
    %p93 = scmp.eq.s32.totalorder %s15, 1
    %p94 = por %p92, %p93
    %p96 = scmp.ne.s32.totalorder %s81, %s95
    %p97 = scmp.eq.s32.totalorder %s15, 0
    %p98 = por %p96, %p97
    %s99 = ssub.s32 %s16, %s28
    %s100 = ssub.s32 %s17, %s24
    %s101 = sor.u32 %s99, %s100
    %p102 = scmp.eq.s32.totalorder %s101, 0
    %s104 = sadd.s32 %s103, 1
    %s105 = scalar_select %p102, %s103, %s104
    %p108 = pneg %p102
    %p109 = scmp.eq.s32.totalorder %s9, 1
    %p110 = por %p108, %p109
    %p111 = scmp.ne.s32.totalorder %s103, %s106
    %p112 = scmp.eq.s32.totalorder %s9, 0
    %p113 = por %p111, %p112
    %p114 = scmp.ne.s32.totalorder %s103, %s106
    %p115 = scmp.eq.s32.totalorder %s14, 1
    %p116 = por %p114, %p115
    %p117 = scmp.ne.s32.totalorder %s106, %s107
    %p118 = scmp.eq.s32.totalorder %s14, 0
    %p119 = por %p117, %p118
    %p120 = scmp.ne.s32.totalorder %s106, %s107
    %p121 = scmp.eq.s32.totalorder %s15, 1
    %p122 = por %p120, %p121
    %p124 = scmp.ne.s32.totalorder %s107, %s123
    %p125 = scmp.eq.s32.totalorder %s15, 0
    %p126 = por %p124, %p125
    %p127 = scmp.le.s32.totalorder 1, %s9
    %p128 = scmp.lt.s32.totalorder %s9, 3
    %p129 = pnand %p127, %p128
    %p130 = pneg %p129
    // Predicated region
    $region9: #{tpu_custom_call.1} parent=5 // pred_check
      _
    $region10: #{tpu_custom_call.1} parent=5 // pred_check_branch
      %132 = sbr.rel (%p129) target = $region12
    $region11: #{tpu_custom_call.1} parent=5 // pred_region
      %s133 = ssub.s32 %s9, 1
      // Predicated region
      $region13: #{tpu_custom_call.1} parent=11 // pred_check
        %p134 = pneg %p70
      $region14: #{tpu_custom_call.1} parent=11 // pred_check_branch
        %136 = sbr.rel (%p134) target = $region16
      $region15: #{tpu_custom_call.1} parent=11 // pred_region
        _
      $region16: #{tpu_custom_call.1} parent=11 // pred_fallthru
        _
      // Predicated region
      $region17: #{tpu_custom_call.1} parent=11 // pred_check
        %p137 = pneg %p91
      $region18: #{tpu_custom_call.1} parent=11 // pred_check_branch
        %139 = sbr.rel (%p137) target = $region20
      $region19: #{tpu_custom_call.1} parent=11 // pred_region
        _
      $region20: #{tpu_custom_call.1} parent=11 // pred_fallthru
        _
    $region12: #{tpu_custom_call.1} parent=5 // pred_fallthru
      _
    %p140 = scmp.lt.s32.totalorder %s9, 2
    // Predicated region
    $region21: #{tpu_custom_call.1} parent=5 // pred_check
      %p141 = pneg %p140
    $region22: #{tpu_custom_call.1} parent=5 // pred_check_branch
      %143 = sbr.rel (%p141) target = $region24
    $region23: #{tpu_custom_call.1} parent=5 // pred_region
      // Predicated region
      $region25: #{tpu_custom_call.1} parent=23 // pred_check
        %p144 = pneg %p43
      $region26: #{tpu_custom_call.1} parent=23 // pred_check_branch
        %146 = sbr.rel (%p144) target = $region28
      $region27: #{tpu_custom_call.1} parent=23 // pred_region
        %p147 = scmp.lt.s32.totalorder %s16, 1
        %s148 = scalar_select %p147, %s16, 1
        %p149 = scmp.lt.s32.totalorder %s17, 0
        %s150 = scalar_select %p149, %s17, 0
        %s151 = smul.addr %s148, 4
        %s152 = sadd.s32 %s150, %s151
        %s153 = smul.addr %s152, 8
        %s154 = scalar_lea.vmem %s0, %s153
      $region28: #{tpu_custom_call.1} parent=23 // pred_fallthru
        _
    $region24: #{tpu_custom_call.1} parent=5 // pred_fallthru
      _
    %p155 = scmp.le.s32.totalorder 1, %s9
    %p156 = scmp.lt.s32.totalorder %s9, 3
    %p157 = pnand %p155, %p156
    %p158 = pneg %p157
    // Predicated region
    $region29: #{tpu_custom_call.1} parent=5 // pred_check
      _
    $region30: #{tpu_custom_call.1} parent=5 // pred_check_branch
      %160 = sbr.rel (%p157) target = $region32
    $region31: #{tpu_custom_call.1} parent=5 // pred_region
      %s161 = ssub.s32 %s9, 1
      %p162 = scmp.lt.s32.totalorder %s18, 1
      %s163 = scalar_select %p162, %s18, 1
      %p164 = scmp.lt.s32.totalorder %s19, 0
      %s165 = scalar_select %p164, %s19, 0
      %s166 = smul.addr %s163, 4
      %s167 = sadd.s32 %s165, %s166
      %s168 = smul.addr %s167, 8
      %s169 = scalar_lea.vmem %s0, %s168
      %p170 = pneg %p49
      %p171 = pneg %p46
      %p172 = pneg %p70
      %p173 = pneg %p67
      %p174 = pneg %p91
      %p175 = pneg %p88
      %p176 = pneg %p119
      %p177 = pneg %p116
      %p178 = scmp.lt.s32.totalorder %s18, 1
      %s179 = scalar_select %p178, %s18, 1
      %p180 = scmp.lt.s32.totalorder %s19, 0
      %s181 = scalar_select %p180, %s19, 0
      %s182 = smul.addr %s179, 4
      %s183 = sadd.s32 %s181, %s182
      %s184 = smul.addr %s183, 8
      %s185 = scalar_lea.vmem %s3, %s184
      %p186 = scmp.lt.s32.totalorder %s18, 1
      %s187 = scalar_select %p186, %s18, 1
      %p188 = scmp.lt.s32.totalorder %s19, 0
      %s189 = scalar_select %p188, %s19, 0
      %s190 = smul.addr %s187, 4
      %s191 = sadd.s32 %s189, %s190
      %s192 = smul.addr %s191, 8
      %s193 = scalar_lea.vmem %s0, %s192
      %p194 = scmp.lt.s32.totalorder %s18, 1
      %s195 = scalar_select %p194, %s18, 1
      %p196 = scmp.lt.s32.totalorder %s19, 0
      %s197 = scalar_select %p196, %s19, 0
      %s198 = smul.addr %s195, 4
      %s199 = sadd.s32 %s197, %s198
      %s200 = smul.addr %s199, 8
      %s201 = scalar_lea.vmem %s3, %s200
      %v202 = vld [vmem:[%s193] sm:$0xff]
      %v203 = vld [vmem:[%s193 + $0x8] sm:$0xff]
      %v204 = vld [vmem:[%s193 + $0x10] sm:$0xff]
      %v205 = vld [vmem:[%s193 + $0x18] sm:$0xff]
      %vm206 = vcmask 130048
      %v207 = vsel %vm206, %v202, 0.0
      %v208 = vsel %vm206, %v203, 0.0
      %v209 = vadd.f32 %v207, %v208
      %v210 = vsel %vm206, %v204, 0.0
      %v211 = vadd.f32 %v209, %v210
      %v212 = vsel %vm206, %v205, 0.0
      %v213 = vadd.f32 %v211, %v212
      %v214 = vrot.slane %v213, 4
      %v215 = vadd.f32 %v213, %v214
      %v216 = vrot.slane %v215, 2
      %v217 = vadd.f32 %v215, %v216
      %v218 = vrot.slane %v217, 1
      %v219 = vadd.f32 %v217, %v218
      %v220 = vmul.f32 %v202, %v202
      %v221 = vmul.f32 %v203, %v203
      %v222 = vmul.f32 %v204, %v204
      %v223 = vmul.f32 %v205, %v205
      %v224 = vsel %vm206, %v220, 0.0
      %v225 = vsel %vm206, %v221, 0.0
      %v226 = vadd.f32 %v224, %v225
      %v227 = vsel %vm206, %v222, 0.0
      %v228 = vadd.f32 %v226, %v227
      %v229 = vsel %vm206, %v223, 0.0
      %v230 = vadd.f32 %v228, %v229
      %v231 = vrot.slane %v230, 4
      %v232 = vadd.f32 %v230, %v231
      %v233 = vrot.slane %v232, 2
      %v234 = vadd.f32 %v232, %v233
      %v235 = vrot.slane %v234, 1
      %v236 = vadd.f32 %v234, %v235
      %v237 = vmul.f32 %v219, 0.03125
      %v238 = vmul.f32 %v236, 0.03125
      %v239 = vmul.f32 %v237, %v237
      %v240 = vsub.f32 %v238, %v239
      %v241 = vmax.f32 %v240, 0.0
      %v242 = vadd.f32 %v241, 1e-05
      %v243 = vrsqrt.pop %v242
      %v244 = vmul.f32 %v243, %v242
      %v245 = vmul.f32 %v244, %v243
      %v246 = vmul.f32 0.5, %v245
      %v247 = vsub.f32 1.5, %v246
      %v248 = vmul.f32 %v243, %v247
      %vm249 = vweird.f32 %v242
      %vm250 = vweird.f32 %v243
      %vm251 = vmor %vm249, %vm250
      %v252 = vsel %vm251, %v243, %v248
      %v253 = vld [vmem:[%s1] sm:$0xff]
      %v254 = vld [vmem:[%s1 + $0x8] sm:$0xff]
      %v255 = vld [vmem:[%s1 + $0x10] sm:$0xff]
      %v256 = vld [vmem:[%s1 + $0x18] sm:$0xff]
      %v257 = vld [vmem:[%s2] sm:$0xff]
      %v258 = vld [vmem:[%s2 + $0x8] sm:$0xff]
      %v259 = vld [vmem:[%s2 + $0x10] sm:$0xff]
      %v260 = vld [vmem:[%s2 + $0x18] sm:$0xff]
      %v261 = vsub.f32 %v202, %v237
      %v262 = vsub.f32 %v203, %v237
      %v263 = vsub.f32 %v204, %v237
      %v264 = vsub.f32 %v205, %v237
      %v265 = vmul.f32 %v261, %v252
      %v266 = vmul.f32 %v262, %v252
      %v267 = vmul.f32 %v263, %v252
      %v268 = vmul.f32 %v264, %v252
      %270 = vset.pattern.permute.xlu0 0
      %271 = vperm.xlu0 %270, %v253
      %v272 = vpop.permute.xlu0 %271
      %275 = vset.pattern.permute.xlu0 0
      %276 = vperm.xlu0 %275, %v254
      %v277 = vpop.permute.xlu0 %276
      %280 = vset.pattern.permute.xlu0 0
      %281 = vperm.xlu0 %280, %v255
      %v282 = vpop.permute.xlu0 %281
      %285 = vset.pattern.permute.xlu0 0
      %286 = vperm.xlu0 %285, %v256
      %v287 = vpop.permute.xlu0 %286
      %v289 = vmul.f32 %v265, %v272
      %v290 = vmul.f32 %v266, %v277
      %v291 = vmul.f32 %v267, %v282
      %v292 = vmul.f32 %v268, %v287
      %294 = vset.pattern.permute.xlu0 0
      %295 = vperm.xlu0 %294, %v257
      %v296 = vpop.permute.xlu0 %295
      %299 = vset.pattern.permute.xlu0 0
      %300 = vperm.xlu0 %299, %v258
      %v301 = vpop.permute.xlu0 %300
      %304 = vset.pattern.permute.xlu0 0
      %305 = vperm.xlu0 %304, %v259
      %v306 = vpop.permute.xlu0 %305
      %309 = vset.pattern.permute.xlu0 0
      %310 = vperm.xlu0 %309, %v260
      %v311 = vpop.permute.xlu0 %310
      %v313 = vadd.f32 %v289, %v296
      %v314 = vadd.f32 %v290, %v301
      %v315 = vadd.f32 %v291, %v306
      %v316 = vadd.f32 %v292, %v311
      %317 = vst.msk [vmem:[%s201] sm:$0xff] %vm206, %v313
      %318 = vst.msk [vmem:[%s201 + $0x8] sm:$0xff] %vm206, %v314
      %319 = vst.msk [vmem:[%s201 + $0x10] sm:$0xff] %vm206, %v315
      %320 = vst.msk [vmem:[%s201 + $0x18] sm:$0xff] %vm206, %v316
      %p321 = scmp.lt.s32.totalorder %s18, 1
      %s322 = scalar_select %p321, %s18, 1
      %p323 = scmp.lt.s32.totalorder %s19, 0
      %s324 = scalar_select %p323, %s19, 0
      %s325 = smul.addr %s322, 4
      %s326 = sadd.s32 %s324, %s325
      %s327 = smul.addr %s326, 8
      %s328 = scalar_lea.vmem %s3, %s327
      // Predicated region
      $region33: #{tpu_custom_call.1} parent=31 // pred_check
        %p329 = pneg %p116
      $region34: #{tpu_custom_call.1} parent=31 // pred_check_branch
        %331 = sbr.rel (%p329) target = $region36
      $region35: #{tpu_custom_call.1} parent=31 // pred_region
        _
      $region36: #{tpu_custom_call.1} parent=31 // pred_fallthru
        _
    $region32: #{tpu_custom_call.1} parent=5 // pred_fallthru
      _
    %p332 = scmp.le.s32.totalorder 2, %s9
    // Predicated region
    $region37: #{tpu_custom_call.1} parent=5 // pred_check
      %p333 = pneg %p332
    $region38: #{tpu_custom_call.1} parent=5 // pred_check_branch
      %335 = sbr.rel (%p333) target = $region40
    $region39: #{tpu_custom_call.1} parent=5 // pred_region
      %s336 = ssub.s32 %s9, 2
      // Predicated region
      $region41: #{tpu_custom_call.1} parent=39 // pred_check
        %p337 = pneg %p122
      $region42: #{tpu_custom_call.1} parent=39 // pred_check_branch
        %339 = sbr.rel (%p337) target = $region44
      $region43: #{tpu_custom_call.1} parent=39 // pred_region
        %p340 = scmp.lt.s32.totalorder %s20, 1
        %s341 = scalar_select %p340, %s20, 1
        %p342 = scmp.lt.s32.totalorder %s21, 0
        %s343 = scalar_select %p342, %s21, 0
        %s344 = smul.addr %s341, 4
        %s345 = sadd.s32 %s343, %s344
        %s346 = smul.addr %s345, 8
        %s347 = scalar_lea.vmem %s3, %s346
      $region44: #{tpu_custom_call.1} parent=39 // pred_fallthru
        _
    $region40: #{tpu_custom_call.1} parent=5 // pred_fallthru
      _
  $region6: #{tpu_custom_call.1} parent=0 // loop_footer
    %s13 = sadd.s32 1, %s9
  $region7: #{tpu_custom_call.1} parent=0 // loop_footer_branch
    %8 = sbr.rel target = $region3
  $region8: #{tpu_custom_call.1} parent=0 // loop_exit
    _

</llo_original>
